<compile_context>
chip_gen: v7x
topology: tpu7x:2x2x1
jax: 0.10.0
libtpu: 0.0.40
codegen_flags: <defaults>
</compile_context>

<pallas_src>
import functools

import jax
import jax.numpy as jnp
import numpy as np
from jax.experimental import pallas as pl
from jax.experimental.pallas import tpu as pltpu

LANES = 1024                          # lane-dense rows: 8 * 128
TARGET_TILE_BYTES = 8 * 1024 * 1024   # ~8 MiB / double-buffered input buffer


def pack_params(params_list, dtype=None, target_tile_bytes=TARGET_TILE_BYTES):
    """Flatten + zero-pad model parameters ONCE into a contiguous (R, LANES) slab.

    Do this outside the training step and reuse the result every call — the
    concat/pad is the expensive HBM pass, not the kernel.

    dtype=None keeps the promoted dtype of the param list (note: mixed
    bf16/f32 lists promote to f32); pass dtype=jnp.bfloat16 explicitly to
    halve the kernel's HBM traffic (the kernel upcasts to f32 for the square,
    but the L2 then squares bf16-rounded values).
    """
    if dtype is not None:
        params_list = [p.astype(dtype) for p in params_list]
    flat = jnp.concatenate([jnp.ravel(p) for p in params_list])
    itemsize = jnp.dtype(flat.dtype).itemsize
    n = int(flat.shape[0])
    rows_needed = -(-n // LANES)
    # Row tile: multiple of 8 sublanes, ~target_tile_bytes per buffer
    # (2048 rows for f32, 4096 for bf16), but never larger than the slab.
    max_rows = max(8, (target_tile_bytes // (LANES * itemsize)) // 8 * 8)
    row_tile = min(max_rows, ((rows_needed + 7) // 8) * 8)
    padded_rows = -(-rows_needed // row_tile) * row_tile
    pad = padded_rows * LANES - n
    flat = jnp.pad(flat, (0, pad))     # zero padding contributes 0 to the L2
    return flat.reshape(padded_rows, LANES), row_tile


def _loss_kernel(tgt_ref, logits_ref, params_ref, out_ref, acc_ref, *, reg):
    # tgt_ref:    (B, 1) i32 VMEM (same tiny block every iteration)
    # logits_ref: (B, C) f32 VMEM (same block every iteration -> DMA'd once)
    # params_ref: (row_tile, LANES) VMEM tile of the packed param slab
    # out_ref:    (8, 128) f32 VMEM block (filled uniformly at finalize)
    # acc_ref:    (8, LANES) f32 VMEM scratch accumulator
    i = pl.program_id(0)
    nk = pl.num_programs(0)

    @pl.when(i == 0)
    def _():
        acc_ref[...] = jnp.zeros_like(acc_ref)

    # --- L2 partial: full-vreg VPU adds, no per-tile cross-sublane reduce ---
    p = params_ref[...].astype(jnp.float32)
    sq = p * p
    acc_ref[...] += jnp.sum(sq.reshape(sq.shape[0] // 8, 8, sq.shape[1]), axis=0)

    # --- finalize: single cross-sublane/lane reduce + cold CE path ---
    @pl.when(i == nk - 1)
    def _():
        l2 = jnp.sum(acc_ref[...])

        x = logits_ref[...].astype(jnp.float32)      # (B, C)
        B, C = x.shape
        m = jnp.max(x, axis=-1, keepdims=True)
        lse = m + jnp.log(jnp.sum(jnp.exp(x - m), axis=-1, keepdims=True))
        col = jax.lax.broadcasted_iota(jnp.int32, (B, C), 1)
        mask = col == tgt_ref[...]                   # (B,1) broadcast vs (B,C)
        tgt_sum = jnp.sum(jnp.where(mask, x, jnp.float32(0.0)))
        ce = (jnp.sum(lse) - tgt_sum) / jnp.float32(B)

        out_ref[...] = jnp.full(out_ref.shape, ce + jnp.float32(reg) * l2,
                                jnp.float32)


def pallas_loss(outputs, targets, packed_params, row_tile, reg=0.0001):
    """Pallas equivalent of Loss.forward(outputs, targets, model).

    `packed_params, row_tile` come from pack_params(model_params) done once.
    """
    B, C = outputs.shape
    R, L = packed_params.shape
    num_tiles = R // row_tile
    assert num_tiles * row_tile == R and num_tiles >= 1

    n_param_bytes = int(packed_params.size) * packed_params.dtype.itemsize
    cost = pl.CostEstimate(
        flops=2 * int(packed_params.size) + 8 * B * C,
        transcendentals=B * C + B,
        bytes_accessed=n_param_bytes + 4 * B * C + 4 * B + 4 * 8 * 128,
    )

    kernel = functools.partial(_loss_kernel, reg=float(reg))
    out = pl.pallas_call(
        kernel,
        out_shape=jax.ShapeDtypeStruct((8, 128), jnp.float32),
        grid_spec=pltpu.PrefetchScalarGridSpec(
            num_scalar_prefetch=0,
            grid=(num_tiles,),
            in_specs=[
                pl.BlockSpec((B, 1), lambda i: (0, 0)),
                pl.BlockSpec((B, C), lambda i: (0, 0)),
                # Default double-buffering; bump to pipeline_mode=pl.Buffered(3)
                # only if profiling still shows exposed DMA on the param stream.
                pl.BlockSpec((row_tile, L), lambda i: (i, 0)),
            ],
            out_specs=pl.BlockSpec((8, 128), lambda i: (0, 0)),
            scratch_shapes=[pltpu.VMEM((8, LANES), jnp.float32)],
        ),
        compiler_params=pltpu.CompilerParams(
            dimension_semantics=("arbitrary",),
            vmem_limit_bytes=40 * 1024 * 1024,
        ),
        cost_estimate=cost,
    )(targets.reshape(B, 1).astype(jnp.int32),
      outputs.astype(jnp.float32),
      packed_params)

    return out[0, 0]


def _reference_loss(outputs, targets, params_list, reg):
    # Pure-JAX reference (torch CrossEntropyLoss mean + L2 of params).
    x = outputs.astype(jnp.float32)
    lse = jax.scipy.special.logsumexp(x, axis=-1)
    tgt = jnp.take_along_axis(x, targets[:, None].astype(jnp.int32), axis=-1)[:, 0]
    ce = jnp.mean(lse - tgt)
    l2 = sum(jnp.sum(p.astype(jnp.float32) ** 2) for p in params_list)
    return ce + reg * l2


if __name__ == "__main__":
    key = jax.random.PRNGKey(0)
    k_logits, k_tgt, k_w1, k_b1, k_w2, k_b2 = jax.random.split(key, 6)

    B, C = 8, 32          # batch=8, num_classes=32
    hidden = 64

    # "outputs" (logits) and integer class targets.
    outputs = jax.random.normal(k_logits, (B, C), dtype=jnp.float32)
    targets = jax.random.randint(k_tgt, (B,), 0, C, dtype=jnp.int32)

    # Deterministic synthetic "model.parameters()" (a tiny MLP: 32 -> 64 -> 32).
    params = [
        0.1 * jax.random.normal(k_w1, (C, hidden), dtype=jnp.float32),
        0.1 * jax.random.normal(k_b1, (hidden,), dtype=jnp.float32),
        0.1 * jax.random.normal(k_w2, (hidden, C), dtype=jnp.float32),
        0.1 * jax.random.normal(k_b2, (C,), dtype=jnp.float32),
    ]

    reg = 0.0001

    # Pack once (outside any training loop) and reuse every step.  Kept in f32
    # here so the 1e-5 check against the f32 reference is exact; pass
    # dtype=jnp.bfloat16 in production to halve HBM traffic.
    packed, row_tile = pack_params(params)

    total = pallas_loss(outputs, targets, packed, row_tile, reg=reg)
    total = jax.block_until_ready(total)

    ref = _reference_loss(outputs, targets, params, reg)
    np.testing.assert_allclose(np.asarray(total), np.asarray(ref),
                               rtol=1e-5, atol=1e-5)

    print("KERNEL_OK")
</pallas_src>

<mosaic_0001>
module attributes {stable_mosaic.version = 11 : i64} {
  func.func @_loss_kernel(%arg0: i32, %arg1: memref<8x1xi32, #tpu.memory_space<vmem>>, %arg2: memref<8x32xf32, #tpu.memory_space<vmem>>, %arg3: memref<8x1024xf32, #tpu.memory_space<vmem>>, %arg4: memref<8x128xf32, #tpu.memory_space<vmem>>, %arg5: memref<8x1024xf32, #tpu.memory_space<vmem>>) attributes {dimension_semantics = [#tpu.dimension_semantics<arbitrary>], iteration_bounds = array<i64: 1>, scalar_prefetch = 0 : i64, scratch_operands = 1 : i64, tpu.core_type = #tpu.core_type<tc>, window_params = [{pipeline_mode = #tpu.pipeline_mode<synchronous>, transform_indices = @transform_0, window_bounds = array<i64: 8, 1>}, {pipeline_mode = #tpu.pipeline_mode<synchronous>, transform_indices = @transform_1, window_bounds = array<i64: 8, 32>}, {transform_indices = @transform_2, window_bounds = array<i64: 8, 1024>}, {pipeline_mode = #tpu.pipeline_mode<synchronous>, transform_indices = @transform_3, window_bounds = array<i64: 8, 128>}]} {
    %c0_i32 = arith.constant 0 : i32
    %0 = arith.cmpi eq, %arg0, %c0_i32 : i32
    %1 = arith.extui %0 : i1 to i32
    %c0_i32_0 = arith.constant 0 : i32
    %2 = arith.cmpi ne, %1, %c0_i32_0 : i32
    scf.if %2 {
      %cst_8 = arith.constant 0.000000e+00 : f32
      %13 = vector.broadcast %cst_8 : f32 to vector<8x1024xf32>
      %c0_9 = arith.constant 0 : index
      %c0_10 = arith.constant 0 : index
      %14 = vector.load %arg5[%c0_9, %c0_10] : memref<8x1024xf32, #tpu.memory_space<vmem>>, vector<8x1024xf32>
      tpu.vector_store %arg5[%c0_9, %c0_10], %13 {strides = array<i32>} : memref<8x1024xf32, #tpu.memory_space<vmem>>, vector<8x1024xf32>,
    } else {
    }
    %c0 = arith.constant 0 : index
    %c0_1 = arith.constant 0 : index
    %3 = vector.load %arg3[%c0, %c0_1] : memref<8x1024xf32, #tpu.memory_space<vmem>>, vector<8x1024xf32>
    %4 = arith.mulf %3, %3 : vector<8x1024xf32>
    %c0_2 = arith.constant 0 : index
    %c0_3 = arith.constant 0 : index
    %5 = vector.load %arg5[%c0_2, %c0_3] : memref<8x1024xf32, #tpu.memory_space<vmem>>, vector<8x1024xf32>
    %6 = vector.shape_cast %4 : vector<8x1024xf32> to vector<1x8x1024xf32>
    %cst = arith.constant dense<0.000000e+00> : vector<8x1024xf32>
    %7 = vector.multi_reduction <add>, %6, %cst [0] : vector<1x8x1024xf32> to vector<8x1024xf32>
    %8 = arith.addf %5, %7 : vector<8x1024xf32>
    %c0_4 = arith.constant 0 : index
    %c0_5 = arith.constant 0 : index
    %9 = vector.load %arg5[%c0_4, %c0_5] : memref<8x1024xf32, #tpu.memory_space<vmem>>, vector<8x1024xf32>
    tpu.vector_store %arg5[%c0_4, %c0_5], %8 {strides = array<i32>} : memref<8x1024xf32, #tpu.memory_space<vmem>>, vector<8x1024xf32>,
    %c0_i32_6 = arith.constant 0 : i32
    %10 = arith.cmpi eq, %arg0, %c0_i32_6 : i32
    %11 = arith.extui %10 : i1 to i32
    %c0_i32_7 = arith.constant 0 : i32
    %12 = arith.cmpi ne, %11, %c0_i32_7 : i32
    scf.if %12 {
      %c0_8 = arith.constant 0 : index
      %c0_9 = arith.constant 0 : index
      %13 = vector.load %arg5[%c0_8, %c0_9] : memref<8x1024xf32, #tpu.memory_space<vmem>>, vector<8x1024xf32>
      %14 = vector.shape_cast %13 : vector<8x1024xf32> to vector<1x8x1024xf32>
      %cst_10 = arith.constant dense<0.000000e+00> : vector<1xf32>
      %15 = vector.multi_reduction <add>, %14, %cst_10 [1, 2] : vector<1x8x1024xf32> to vector<1xf32>
      %16 = vector.shape_cast %15 : vector<1xf32> to vector<1x1x1xf32>
      %17 = vector.extract %16[0, 0, 0] : f32 from vector<1x1x1xf32>
      %c0_11 = arith.constant 0 : index
      %c0_12 = arith.constant 0 : index
      %18 = vector.load %arg2[%c0_11, %c0_12] : memref<8x32xf32, #tpu.memory_space<vmem>>, vector<8x32xf32>
      %cst_13 = arith.constant dense<0xFF800000> : vector<8xf32>
      %19 = vector.multi_reduction <maximumf>, %18, %cst_13 [1] : vector<8x32xf32> to vector<8xf32>
      %20 = vector.shape_cast %19 : vector<8xf32> to vector<8x1xf32>
      %21 = vector.broadcast %20 : vector<8x1xf32> to vector<8x32xf32>
      %22 = arith.subf %18, %21 : vector<8x32xf32>
      %23 = math.exp %22 : vector<8x32xf32>
      %cst_14 = arith.constant dense<0.000000e+00> : vector<8xf32>
      %24 = vector.multi_reduction <add>, %23, %cst_14 [1] : vector<8x32xf32> to vector<8xf32>
      %25 = vector.shape_cast %24 : vector<8xf32> to vector<8x1xf32>
      %26 = math.log %25 : vector<8x1xf32>
      %27 = arith.addf %20, %26 : vector<8x1xf32>
      %28 = tpu.iota {dimensions = array<i32: 1>} : vector<8x32xi32>
      %c0_15 = arith.constant 0 : index
      %c0_16 = arith.constant 0 : index
      %29 = vector.load %arg1[%c0_15, %c0_16] : memref<8x1xi32, #tpu.memory_space<vmem>>, vector<8x1xi32>
      %30 = vector.broadcast %29 : vector<8x1xi32> to vector<8x32xi32>
      %31 = arith.cmpi eq, %28, %30 : vector<8x32xi32>
      %cst_17 = arith.constant 0.000000e+00 : f32
      %32 = vector.broadcast %cst_17 : f32 to vector<8x32xf32>
      %33 = arith.select %31, %18, %32 : vector<8x32xi1>, vector<8x32xf32>
      %34 = vector.shape_cast %33 : vector<8x32xf32> to vector<1x8x32xf32>
      %cst_18 = arith.constant dense<0.000000e+00> : vector<1xf32>
      %35 = vector.multi_reduction <add>, %34, %cst_18 [1, 2] : vector<1x8x32xf32> to vector<1xf32>
      %36 = vector.shape_cast %35 : vector<1xf32> to vector<1x1x1xf32>
      %37 = vector.extract %36[0, 0, 0] : f32 from vector<1x1x1xf32>
      %38 = vector.shape_cast %27 : vector<8x1xf32> to vector<1x8x1xf32>
      %cst_19 = arith.constant dense<0.000000e+00> : vector<1xf32>
      %39 = vector.multi_reduction <add>, %38, %cst_19 [1, 2] : vector<1x8x1xf32> to vector<1xf32>
      %40 = vector.shape_cast %39 : vector<1xf32> to vector<1x1x1xf32>
      %41 = vector.extract %40[0, 0, 0] : f32 from vector<1x1x1xf32>
      %42 = arith.subf %41, %37 : f32
      %cst_20 = arith.constant 8.000000e+00 : f32
      %43 = arith.divf %42, %cst_20 : f32
      %cst_21 = arith.constant 9.99999974E-5 : f32
      %44 = arith.mulf %cst_21, %17 : f32
      %45 = arith.addf %43, %44 : f32
      %46 = vector.broadcast %45 : f32 to vector<8x128xf32>
      %c0_22 = arith.constant 0 : index
      %c0_23 = arith.constant 0 : index
      %47 = vector.load %arg4[%c0_22, %c0_23] : memref<8x128xf32, #tpu.memory_space<vmem>>, vector<8x128xf32>
      tpu.vector_store %arg4[%c0_22, %c0_23], %46 {strides = array<i32>} : memref<8x128xf32, #tpu.memory_space<vmem>>, vector<8x128xf32>,
    } else {
    }
    return
  }
  func.func @transform_0(%arg0: i32) -> (i32, i32) {
    %c0_i32 = arith.constant 0 : i32
    %c0_i32_0 = arith.constant 0 : i32
    %c0_i32_1 = arith.constant 0 : i32
    return %c0_i32, %c0_i32_0 : i32, i32
  }
  func.func @transform_1(%arg0: i32) -> (i32, i32) {
    %c0_i32 = arith.constant 0 : i32
    %c0_i32_0 = arith.constant 0 : i32
    %c0_i32_1 = arith.constant 0 : i32
    return %c0_i32, %c0_i32_0 : i32, i32
  }
  func.func @transform_2(%arg0: i32) -> (i32, i32) {
    %c0_i32 = arith.constant 0 : i32
    %c0_i32_0 = arith.constant 0 : i32
    return %arg0, %c0_i32 : i32, i32
  }
  func.func @transform_3(%arg0: i32) -> (i32, i32) {
    %c0_i32 = arith.constant 0 : i32
    %c0_i32_0 = arith.constant 0 : i32
    %c0_i32_1 = arith.constant 0 : i32
    return %c0_i32, %c0_i32_0 : i32, i32
  }
}

</mosaic_0001>

<llo_original>
// kernel: tpu_custom_call.1
$region0: #{tpu_custom_call.1}
  #allocation0 [shape = 'u32[]', space=smem, size = 0x4, offset = 0x4, fixed_abs, tag = 'smem constant byte address 0x4 - core index']
  #allocation1 [shape = 'u32[144,128]{1,0:T(1,128)}', space=vmem, size = 0x12000, scoped, tag = 'internal scratch']
  #allocation2 [shape = 'f32[8,1024]{1,0:T(8,128)}', space=vmem, size = 0x8000, scoped, tag = 'scratch operand']
  %s0 = inlined_call_operand.vmem [shape: s32[8,1], index: 0, kind: input, shape index: {}]
  %s1 = inlined_call_operand.vmem [shape: f32[8,32], index: 1, kind: input, shape index: {}]
  %s2 = inlined_call_operand.hbm [shape: f32[8,1024], index: 2, kind: input, shape index: {}]
  %s3 = inlined_call_operand.hbm [shape: f32[8,128], index: 3, kind: output, shape index: {}]
  %s4 = sld [smem:[#allocation0]]
  $region34: #{tpu_custom_call.1} parent=0
    _
  %s6 = ssub.s32 1, %s4
  %s7 = scalar_select 0, %s6, %s4
  $region1: #{tpu_custom_call.1} parent=0
    #allocation3 [shape = 'u8[32768]{0}', space=vmem, size = 0x8000, scoped, tag = 'input window, operand 2, single buffered']
    #allocation4 [shape = 's32[1]{0}', space=sflag, size = 0x4, scoped, tag = 'scoped memory for tpu_custom_call.1']
    #allocation5 [shape = 's32[1]{0}', space=sflag, size = 0x4, scoped, tag = 'scoped memory for tpu_custom_call.1']
    #allocation6 [shape = 'u8[4096]{0}', space=vmem, size = 0x1000, scoped, tag = 'output window, operand 0, single buffered']
    %8 = vsyncpa [#allocation4], 0
    %9 = vsyncpa [#allocation5], 0
    // Predicated region
    $region2: #{tpu_custom_call.1} parent=1 // pred_check
      _
    $region3: #{tpu_custom_call.1} parent=1 // pred_check_branch
      %11 = sbr.rel (0) target = $region5
    $region4: #{tpu_custom_call.1} parent=1 // pred_region
      _
    $region5: #{tpu_custom_call.1} parent=1 // pred_fallthru
      _
    // Predicated region
    $region6: #{tpu_custom_call.1} parent=1 // pred_check
      _
    $region7: #{tpu_custom_call.1} parent=1 // pred_check_branch
      %13 = sbr.rel (0) target = $region9
    $region8: #{tpu_custom_call.1} parent=1 // pred_region
      _
    $region9: #{tpu_custom_call.1} parent=1 // pred_fallthru
      _
    // Predicated region
    $region10: #{tpu_custom_call.1} parent=1 // pred_check
      _
    $region11: #{tpu_custom_call.1} parent=1 // pred_check_branch
      %15 = sbr.rel (0) target = $region13
    $region12: #{tpu_custom_call.1} parent=1 // pred_region
      %s17 = ssub.s32 1024, 1024
      %18 = vsyncadd [#allocation4], %s17
      %s20 = sshll.u32 [#allocation3], 4
      %s21 = int_to_ptr.vmem [resolvable:$true] %s20
      %23 = dma.hbm_to_vmem [thread:$0]  %s2, 1024, %s21, [#allocation4]
    $region13: #{tpu_custom_call.1} parent=1 // pred_fallthru
      _
    // Predicated region
    $region14: #{tpu_custom_call.1} parent=1 // pred_check
      _
    $region15: #{tpu_custom_call.1} parent=1 // pred_check_branch
      %25 = sbr.rel (0) target = $region17
    $region16: #{tpu_custom_call.1} parent=1 // pred_region
      %26 = dma.done [#allocation4], 1024
    $region17: #{tpu_custom_call.1} parent=1 // pred_fallthru
      _
    %p27 = scmp.eq.s32.totalorder 0, 0
    // Predicated region
    $region18: #{tpu_custom_call.1} parent=1 // pred_check
      %p28 = pneg %p27
    $region19: #{tpu_custom_call.1} parent=1 // pred_check_branch
      %30 = sbr.rel (%p28) target = $region21
    $region20: #{tpu_custom_call.1} parent=1 // pred_region
      %31 = vst [vmem:[#allocation2] sm:$0xff] 0.0
      %32 = vst [vmem:[#allocation2 + $0x8] sm:$0xff] 0.0
      %33 = vst [vmem:[#allocation2 + $0x10] sm:$0xff] 0.0
      %34 = vst [vmem:[#allocation2 + $0x18] sm:$0xff] 0.0
      %35 = vst [vmem:[#allocation2 + $0x20] sm:$0xff] 0.0
      %36 = vst [vmem:[#allocation2 + $0x28] sm:$0xff] 0.0
      %37 = vst [vmem:[#allocation2 + $0x30] sm:$0xff] 0.0
      %38 = vst [vmem:[#allocation2 + $0x38] sm:$0xff] 0.0
    $region21: #{tpu_custom_call.1} parent=1 // pred_fallthru
      _
    %v39 = vld [vmem:[#allocation3] sm:$0xff]
    %v40 = vld [vmem:[#allocation3 + $0x8] sm:$0xff]
    %v41 = vld [vmem:[#allocation3 + $0x10] sm:$0xff]
    %v42 = vld [vmem:[#allocation3 + $0x18] sm:$0xff]
    %v43 = vld [vmem:[#allocation3 + $0x20] sm:$0xff]
    %v44 = vld [vmem:[#allocation3 + $0x28] sm:$0xff]
    %v45 = vld [vmem:[#allocation3 + $0x30] sm:$0xff]
    %v46 = vld [vmem:[#allocation3 + $0x38] sm:$0xff]
    %v47 = vmul.f32 %v39, %v39
    %v48 = vmul.f32 %v40, %v40
    %v49 = vmul.f32 %v41, %v41
    %v50 = vmul.f32 %v42, %v42
    %v51 = vmul.f32 %v43, %v43
    %v52 = vmul.f32 %v44, %v44
    %v53 = vmul.f32 %v45, %v45
    %v54 = vmul.f32 %v46, %v46
    %v55 = vld [vmem:[#allocation2] sm:$0xff]
    %v56 = vld [vmem:[#allocation2 + $0x8] sm:$0xff]
    %v57 = vld [vmem:[#allocation2 + $0x10] sm:$0xff]
    %v58 = vld [vmem:[#allocation2 + $0x18] sm:$0xff]
    %v59 = vld [vmem:[#allocation2 + $0x20] sm:$0xff]
    %v60 = vld [vmem:[#allocation2 + $0x28] sm:$0xff]
    %v61 = vld [vmem:[#allocation2 + $0x30] sm:$0xff]
    %v62 = vld [vmem:[#allocation2 + $0x38] sm:$0xff]
    %v63 = vadd.f32 %v47, 0.0
    %v64 = vadd.f32 %v48, 0.0
    %v65 = vadd.f32 %v49, 0.0
    %v66 = vadd.f32 %v50, 0.0
    %v67 = vadd.f32 %v51, 0.0
    %v68 = vadd.f32 %v52, 0.0
    %v69 = vadd.f32 %v53, 0.0
    %v70 = vadd.f32 %v54, 0.0
    %v71 = vadd.f32 %v55, %v63
    %v72 = vadd.f32 %v56, %v64
    %v73 = vadd.f32 %v57, %v65
    %v74 = vadd.f32 %v58, %v66
    %v75 = vadd.f32 %v59, %v67
    %v76 = vadd.f32 %v60, %v68
    %v77 = vadd.f32 %v61, %v69
    %v78 = vadd.f32 %v62, %v70
    %79 = vst [vmem:[#allocation2] sm:$0xff] %v71
    %80 = vst [vmem:[#allocation2 + $0x8] sm:$0xff] %v72
    %81 = vst [vmem:[#allocation2 + $0x10] sm:$0xff] %v73
    %82 = vst [vmem:[#allocation2 + $0x18] sm:$0xff] %v74
    %83 = vst [vmem:[#allocation2 + $0x20] sm:$0xff] %v75
    %84 = vst [vmem:[#allocation2 + $0x28] sm:$0xff] %v76
    %85 = vst [vmem:[#allocation2 + $0x30] sm:$0xff] %v77
    %86 = vst [vmem:[#allocation2 + $0x38] sm:$0xff] %v78
    // Predicated region
    $region22: #{tpu_custom_call.1} parent=1 // pred_check
      %p87 = pneg %p27
    $region23: #{tpu_custom_call.1} parent=1 // pred_check_branch
      %89 = sbr.rel (%p87) target = $region25
    $region24: #{tpu_custom_call.1} parent=1 // pred_region
      %v90 = vld [vmem:[#allocation2] sm:$0xff]
      %v91 = vld [vmem:[#allocation2 + $0x8] sm:$0xff]
      %v92 = vld [vmem:[#allocation2 + $0x10] sm:$0xff]
      %v93 = vld [vmem:[#allocation2 + $0x18] sm:$0xff]
      %v94 = vld [vmem:[#allocation2 + $0x20] sm:$0xff]
      %v95 = vld [vmem:[#allocation2 + $0x28] sm:$0xff]
      %v96 = vld [vmem:[#allocation2 + $0x30] sm:$0xff]
      %v97 = vld [vmem:[#allocation2 + $0x38] sm:$0xff]
      %v98 = vadd.f32 %v90, %v91
      %v99 = vadd.f32 %v98, %v92
      %v100 = vadd.f32 %v99, %v93
      %v101 = vadd.f32 %v100, %v94
      %v102 = vadd.f32 %v101, %v95
      %v103 = vadd.f32 %v102, %v96
      %v104 = vadd.f32 %v103, %v97
      %105 = vadd.xlane.f32.xlu0 %v104
      %v106 = vpop.xlane.xlu0 %105
      %v107 = vrot.slane %v106, 4
      %v108 = vadd.f32 %v106, %v107
      %v109 = vrot.slane %v108, 2
      %v110 = vadd.f32 %v108, %v109
      %v111 = vrot.slane %v110, 1
      %v112 = vadd.f32 %v110, %v111
      %s113 = vtos %v112
      %v114 = vld [vmem:[%s1] sm:$0xff]
      %vm115 = vcmask 261120
      %v116 = vsel %vm115, %v114, -inf
      %117 = vmax.xlane.f32.xlu0 %v116
      %v118 = vpop.xlane.xlu0 %117
      %v119 = vsub.f32 %v114, %v118
      %v120 = vmul.f32 %v119, 1.442695
      %v121 = vpow.pop %v120
      %v122 = vsel %vm115, %v121, 0.0
      %123 = vadd.xlane.f32.xlu0 %v122
      %v124 = vpop.xlane.xlu0 %123
      %v125 = vlog2.pop %v124
      %v126 = vmul.f32 %v125, 0.6931472
      %v127 = vadd.f32 %v118, %v126
      %v128 = vlaneseq
      %v129 = vand.u32 %v128, 127
      %v130 = vld [vmem:[%s0] sm:$0xff]
      %131 = vset.pattern.permute.xlu0 0
      %132 = vperm.xlu0 %131, %v130
      %v133 = vpop.permute.xlu0 %132
      %vm134 = vcmp.eq.s32.totalorder %v129, %v133
      %v135 = vsel %vm134, %v114, 0.0
      %v136 = vsel %vm115, %v135, 0.0
      %137 = vadd.xlane.f32.xlu0 %v136
      %v138 = vpop.xlane.xlu0 %137
      %v139 = vrot.slane %v138, 4
      %v140 = vadd.f32 %v138, %v139
      %v141 = vrot.slane %v140, 2
      %v142 = vadd.f32 %v140, %v141
      %v143 = vrot.slane %v142, 1
      %v144 = vadd.f32 %v142, %v143
      %s145 = vtos %v144
      %vm146 = vcmask 7168
      %v147 = vsel %vm146, %v127, 0.0
      %148 = vadd.xlane.f32.xlu0 %v147
      %v149 = vpop.xlane.xlu0 %148
      %v150 = vrot.slane %v149, 4
      %v151 = vadd.f32 %v149, %v150
      %v152 = vrot.slane %v151, 2
      %v153 = vadd.f32 %v151, %v152
      %v154 = vrot.slane %v153, 1
      %v155 = vadd.f32 %v153, %v154
      %s156 = vtos %v155
      %s157 = ssub.f32 %s156, %s145
      %v158 = vrcp.pop 8.0
      %s159 = vtos %v158
      %s160 = smul.f32 %s157, %s159
      %s161 = smul.f32 %s113, 0.0001
      %s162 = sadd.f32 %s160, %s161
      %v163 = vstv %s162
      %164 = vst [vmem:[#allocation6] sm:$0xff] %v163
    $region25: #{tpu_custom_call.1} parent=1 // pred_fallthru
      _
    // Predicated region
    $region26: #{tpu_custom_call.1} parent=1 // pred_check
      _
    $region27: #{tpu_custom_call.1} parent=1 // pred_check_branch
      %166 = sbr.rel (0) target = $region29
    $region28: #{tpu_custom_call.1} parent=1 // pred_region
      %s168 = ssub.s32 128, 128
      %169 = vsyncadd [#allocation5], %s168
      %s171 = sshll.u32 [#allocation6], 4
      %s172 = int_to_ptr.vmem [resolvable:$true] %s171
      %174 = dma.vmem_to_hbm [thread:$0]  %s172, 128, %s3, [#allocation5]
    $region29: #{tpu_custom_call.1} parent=1 // pred_fallthru
      _
    // Predicated region
    $region30: #{tpu_custom_call.1} parent=1 // pred_check
      _
    $region31: #{tpu_custom_call.1} parent=1 // pred_check_branch
      %176 = sbr.rel (0) target = $region33
    $region32: #{tpu_custom_call.1} parent=1 // pred_region
      %177 = dma.done [#allocation5], 128
    $region33: #{tpu_custom_call.1} parent=1 // pred_fallthru
      _
    %178 = vsyncpa [#allocation4], 1
    %179 = vsyncpa [#allocation5], 1

</llo_original>
